<compile_context>
chip_gen: v5e
topology: v5e:2x2
jax: 0.10.0
libtpu: 0.0.40
codegen_flags: <defaults>
</compile_context>

<pallas_src>
import jax
import jax.numpy as jnp
from jax.experimental import pallas as pl
from jax.experimental.pallas import tpu as pltpu

_LANE = 128


def _pinn_mlp_kernel(x_ref, w1_ref, b1_ref, w2_ref, b2_ref, w3_ref, b3_ref, o_ref):
    # Shapes (feature-major / "transposed" layout):
    #   x_ref : (2, tile)      -- each coordinate is a full-lane row
    #   w1_ref: (H, 2)  f32    b1_ref: (H, 1)  f32
    #   w2_ref: (H, H)  mm dt  b2_ref: (H, 1)  f32     (w2_ref == w2.T)
    #   w3_ref: (Op, H) mm dt  b3_ref: (Op, 1) f32     (w3_ref == padded w3.T)
    #   o_ref : (Op, tile)
    x0 = x_ref[0:1, :].astype(jnp.float32)   # (1, tile)
    x1 = x_ref[1:2, :].astype(jnp.float32)   # (1, tile)
    w1 = w1_ref[...].astype(jnp.float32)     # (H, 2)

    # Layer 1 (contraction depth K=2): two broadcast multiply-adds on the VPU
    # + f32 tanh on the EUP.  Only the H real sublanes are touched.
    h = jnp.tanh(w1[:, 0:1] * x0 + w1[:, 1:2] * x1 + b1_ref[...])   # (H, tile)

    # Layer 2: MXU matmul (bf16 or f32 operands), f32 accumulate, f32 tanh.
    h = jnp.tanh(
        jnp.dot(w2_ref[...], h.astype(w2_ref.dtype),
                preferred_element_type=jnp.float32)
        + b2_ref[...]
    )                                                                # (H, tile)

    # Output layer (linear).  (Op, H) @ (H, tile) -> (Op, tile); lane-dense,
    # unmasked store of only 8 sublanes worth of channels.
    out = jnp.dot(w3_ref[...], h.astype(w3_ref.dtype),
                  preferred_element_type=jnp.float32) + b3_ref[...]
    o_ref[...] = out.astype(o_ref.dtype)


def _round_up(n, m):
    return ((n + m - 1) // m) * m


def pinn_forward(x, params, *, tile_n=8192, matmul_dtype=jnp.bfloat16):
    """Fused PINN MLP forward: x (N, 2) -> uvp (N, 5)."""
    w1, b1, w2, b2, w3, b3 = params
    N, in_dim = x.shape
    assert in_dim == 2, "kernel layer 1 is specialized to 2 input coordinates"
    H = w1.shape[1]
    out_dim = w3.shape[1]

    # Channels pad only to 8 sublanes (exact: padded weight rows/bias are 0).
    Op = _round_up(out_dim, 8)

    # Feature-major weights: features on sublanes, contraction dims on lanes.
    w1t = w1.T.astype(jnp.float32)                               # (H, 2)
    b1t = b1.reshape(H, 1).astype(jnp.float32)                   # (H, 1)
    w2t = w2.T.astype(matmul_dtype)                              # (H, H)
    b2t = b2.reshape(H, 1).astype(jnp.float32)                   # (H, 1)
    w3t = jnp.pad(w3.T.astype(matmul_dtype),
                  ((0, Op - out_dim), (0, 0)))                   # (Op, H)
    b3t = jnp.pad(b3.reshape(out_dim, 1).astype(jnp.float32),
                  ((0, Op - out_dim), (0, 0)))                   # (Op, 1)

    # Point-dimension tiling: big lane-aligned tiles amortize the ~600-cycle
    # per-grid-step overhead.  When the grid has >1 step, keep it even so the
    # "parallel" axis can shard across v7x's two TensorCores.
    if N > tile_n:
        grid_n = pl.cdiv(N, tile_n)
        if grid_n % 2 == 1:
            grid_n += 1
        tile = _round_up(pl.cdiv(N, grid_n), _LANE)
    else:
        tile = _round_up(N, _LANE)
    N_pad = _round_up(N, tile)
    grid_n = N_pad // tile

    # Transpose input to (2, N): each coordinate becomes a full-lane row, so
    # the per-step x buffer is ~8*tile bytes instead of a lane-padded slab.
    xt = x.T
    if N_pad != N:
        xt = jnp.pad(xt, ((0, 0), (0, N_pad - N)))

    # Whole-array, VMEM-resident specs for the (tiny) weights/biases.
    vmem = pl.BlockSpec(memory_space=pltpu.MemorySpace.VMEM)

    itemsize = jnp.dtype(x.dtype).itemsize
    w_bytes = sum(int(a.size) * jnp.dtype(a.dtype).itemsize
                  for a in (w1t, b1t, w2t, b2t, w3t, b3t))
    cost = pl.CostEstimate(
        flops=2 * N_pad * (in_dim * H + H * H + H * Op),
        transcendentals=2 * N_pad * H,
        bytes_accessed=in_dim * N_pad * itemsize + Op * N_pad * itemsize + w_bytes,
    )

    out_pad = pl.pallas_call(
        _pinn_mlp_kernel,
        out_shape=jax.ShapeDtypeStruct((Op, N_pad), x.dtype),
        grid_spec=pltpu.PrefetchScalarGridSpec(
            num_scalar_prefetch=0,
            grid=(grid_n,),
            in_specs=[
                pl.BlockSpec((in_dim, tile), lambda i: (0, i)),  # x tile
                vmem,  # w1t
                vmem,  # b1t
                vmem,  # w2t
                vmem,  # b2t
                vmem,  # w3t
                vmem,  # b3t
            ],
            out_specs=pl.BlockSpec((Op, tile), lambda i: (0, i)),
        ),
        compiler_params=pltpu.CompilerParams(
            dimension_semantics=("parallel",),
        ),
        cost_estimate=cost,
    )(xt, w1t, b1t, w2t, b2t, w3t, b3t)

    # Strip channel/point padding and restore the (N, out_dim) interface.
    # The padded slab is only Op * N_pad * 4 B (~32 B/point), so this is cheap.
    return out_pad[:out_dim, :N].T


def init_params(key, in_dim=2, hidden=32, out_dim=5, dtype=jnp.float32):
    k1, k2, k3 = jax.random.split(key, 3)
    # Deterministic Xavier-ish init (synthetic weights, not a checkpoint).
    w1 = jax.random.normal(k1, (in_dim, hidden), dtype) * (1.0 / jnp.sqrt(in_dim))
    b1 = jnp.zeros((1, hidden), dtype)
    w2 = jax.random.normal(k2, (hidden, hidden), dtype) * (1.0 / jnp.sqrt(hidden))
    b2 = jnp.zeros((1, hidden), dtype)
    w3 = jax.random.normal(k3, (hidden, out_dim), dtype) * (1.0 / jnp.sqrt(hidden))
    b3 = jnp.zeros((1, out_dim), dtype)
    return (w1, b1, w2, b2, w3, b3)


def pinn_forward_ref(x, params):
    """Pure-JAX reference for correctness checking."""
    w1, b1, w2, b2, w3, b3 = params
    h = jnp.tanh(x @ w1 + b1)
    h = jnp.tanh(h @ w2 + b2)
    return h @ w3 + b3


if __name__ == "__main__":
    key = jax.random.PRNGKey(0)
    k_x, k_p, k_x2 = jax.random.split(key, 3)

    N, in_dim, hidden, out_dim = 2048, 2, 32, 5
    x = jax.random.uniform(k_x, (N, in_dim), jnp.float32)
    params = init_params(k_p, in_dim=in_dim, hidden=hidden, out_dim=out_dim)

    ref = pinn_forward_ref(x, params)

    # Default bf16-MXU fast path and exact f32 path (single-tile grid).
    uvp = pinn_forward(x, params)
    uvp_f32 = pinn_forward(x, params, matmul_dtype=jnp.float32)
    jax.block_until_ready((uvp, uvp_f32))
    assert uvp.shape == (N, out_dim)
    assert jnp.allclose(uvp_f32, ref, atol=1e-4, rtol=1e-4)
    assert jnp.allclose(uvp, ref, atol=5e-2, rtol=5e-2)

    # Multi-tile grid (tile_n=512 -> grid of 4, even for v7x's two TCs).
    uvp_multi = pinn_forward(x, params, tile_n=512, matmul_dtype=jnp.float32)
    jax.block_until_ready(uvp_multi)
    assert jnp.allclose(uvp_multi, ref, atol=1e-4, rtol=1e-4)

    # Ragged N exercises the point-padding path (N=300 -> tile=384, grid=1).
    x_small = jax.random.uniform(k_x2, (300, in_dim), jnp.float32)
    out_small = pinn_forward(x_small, params, matmul_dtype=jnp.float32)
    jax.block_until_ready(out_small)
    assert jnp.allclose(out_small, pinn_forward_ref(x_small, params),
                        atol=1e-4, rtol=1e-4)

    # TODO(synk): the autograd-based PDE residual loss() has no direct Pallas
    # equivalent here; only the forward pass (the hot matmul path) is
    # kernelized (gradients would be taken with jax.grad around this call).
    print("KERNEL_OK")
</pallas_src>

<mosaic_0001>
module attributes {stable_mosaic.version = 11 : i64} {
  func.func @_pinn_mlp_kernel(%arg0: i32, %arg1: memref<2x2048xf32, #tpu.memory_space<vmem>>, %arg2: memref<32x2xf32, #tpu.memory_space<vmem>>, %arg3: memref<32x1xf32, #tpu.memory_space<vmem>>, %arg4: memref<32x32xbf16, #tpu.memory_space<vmem>>, %arg5: memref<32x1xf32, #tpu.memory_space<vmem>>, %arg6: memref<8x32xbf16, #tpu.memory_space<vmem>>, %arg7: memref<8x1xf32, #tpu.memory_space<vmem>>, %arg8: memref<8x2048xf32, #tpu.memory_space<vmem>>) attributes {dimension_semantics = [#tpu.dimension_semantics<parallel>], iteration_bounds = array<i64: 1>, scalar_prefetch = 0 : i64, scratch_operands = 0 : i64, tpu.core_type = #tpu.core_type<tc>, window_params = [{transform_indices = @transform_0, window_bounds = array<i64: 2, 2048>}, {pipeline_mode = #tpu.pipeline_mode<synchronous>, transform_indices = @transform_1, window_bounds = array<i64: 32, 2>}, {pipeline_mode = #tpu.pipeline_mode<synchronous>, transform_indices = @transform_2, window_bounds = array<i64: 32, 1>}, {pipeline_mode = #tpu.pipeline_mode<synchronous>, transform_indices = @transform_3, window_bounds = array<i64: 32, 32>}, {pipeline_mode = #tpu.pipeline_mode<synchronous>, transform_indices = @transform_4, window_bounds = array<i64: 32, 1>}, {pipeline_mode = #tpu.pipeline_mode<synchronous>, transform_indices = @transform_5, window_bounds = array<i64: 8, 32>}, {pipeline_mode = #tpu.pipeline_mode<synchronous>, transform_indices = @transform_6, window_bounds = array<i64: 8, 1>}, {transform_indices = @transform_7, window_bounds = array<i64: 8, 2048>}]} {
    %c0 = arith.constant 0 : index
    %c0_0 = arith.constant 0 : index
    %0 = vector.load %arg1[%c0, %c0_0] : memref<2x2048xf32, #tpu.memory_space<vmem>>, vector<1x2048xf32>
    %c1 = arith.constant 1 : index
    %c0_1 = arith.constant 0 : index
    %1 = vector.load %arg1[%c1, %c0_1] : memref<2x2048xf32, #tpu.memory_space<vmem>>, vector<1x2048xf32>
    %c0_2 = arith.constant 0 : index
    %c0_3 = arith.constant 0 : index
    %2 = vector.load %arg2[%c0_2, %c0_3] : memref<32x2xf32, #tpu.memory_space<vmem>>, vector<32x2xf32>
    %3 = vector.extract_strided_slice %2 {offsets = [0, 0], sizes = [32, 1], strides = [1, 1]} : vector<32x2xf32> to vector<32x1xf32>
    %4 = vector.broadcast %3 : vector<32x1xf32> to vector<32x2048xf32>
    %5 = vector.broadcast %0 : vector<1x2048xf32> to vector<32x2048xf32>
    %6 = arith.mulf %4, %5 : vector<32x2048xf32>
    %7 = vector.extract_strided_slice %2 {offsets = [0, 1], sizes = [32, 1], strides = [1, 1]} : vector<32x2xf32> to vector<32x1xf32>
    %8 = vector.broadcast %7 : vector<32x1xf32> to vector<32x2048xf32>
    %9 = vector.broadcast %1 : vector<1x2048xf32> to vector<32x2048xf32>
    %10 = arith.mulf %8, %9 : vector<32x2048xf32>
    %11 = arith.addf %6, %10 : vector<32x2048xf32>
    %c0_4 = arith.constant 0 : index
    %c0_5 = arith.constant 0 : index
    %12 = vector.load %arg3[%c0_4, %c0_5] : memref<32x1xf32, #tpu.memory_space<vmem>>, vector<32x1xf32>
    %13 = vector.broadcast %12 : vector<32x1xf32> to vector<32x2048xf32>
    %14 = arith.addf %11, %13 : vector<32x2048xf32>
    %15 = math.tanh %14 : vector<32x2048xf32>
    %c0_6 = arith.constant 0 : index
    %c0_7 = arith.constant 0 : index
    %16 = vector.load %arg4[%c0_6, %c0_7] : memref<32x32xbf16, #tpu.memory_space<vmem>>, vector<32x32xbf16>
    %17 = arith.truncf %15 : vector<32x2048xf32> to vector<32x2048xbf16>
    %cst = arith.constant dense<0.000000e+00> : vector<32x2048xf32>
    %18 = tpu.matmul %16, %17, %cst {dimension_numbers = #tpu.dot_dimension_numbers<[1], [0], [0], [1], [0, 0, 1, 1], [], []>} : vector<32x32xbf16>, vector<32x2048xbf16>, vector<32x2048xf32> -> vector<32x2048xf32>
    %c0_8 = arith.constant 0 : index
    %c0_9 = arith.constant 0 : index
    %19 = vector.load %arg5[%c0_8, %c0_9] : memref<32x1xf32, #tpu.memory_space<vmem>>, vector<32x1xf32>
    %20 = vector.broadcast %19 : vector<32x1xf32> to vector<32x2048xf32>
    %21 = arith.addf %18, %20 : vector<32x2048xf32>
    %22 = math.tanh %21 : vector<32x2048xf32>
    %c0_10 = arith.constant 0 : index
    %c0_11 = arith.constant 0 : index
    %23 = vector.load %arg6[%c0_10, %c0_11] : memref<8x32xbf16, #tpu.memory_space<vmem>>, vector<8x32xbf16>
    %24 = arith.truncf %22 : vector<32x2048xf32> to vector<32x2048xbf16>
    %cst_12 = arith.constant dense<0.000000e+00> : vector<8x2048xf32>
    %25 = tpu.matmul %23, %24, %cst_12 {dimension_numbers = #tpu.dot_dimension_numbers<[1], [0], [0], [1], [0, 0, 1, 1], [], []>} : vector<8x32xbf16>, vector<32x2048xbf16>, vector<8x2048xf32> -> vector<8x2048xf32>
    %c0_13 = arith.constant 0 : index
    %c0_14 = arith.constant 0 : index
    %26 = vector.load %arg7[%c0_13, %c0_14] : memref<8x1xf32, #tpu.memory_space<vmem>>, vector<8x1xf32>
    %27 = vector.broadcast %26 : vector<8x1xf32> to vector<8x2048xf32>
    %28 = arith.addf %25, %27 : vector<8x2048xf32>
    %c0_15 = arith.constant 0 : index
    %c0_16 = arith.constant 0 : index
    %29 = vector.load %arg8[%c0_15, %c0_16] : memref<8x2048xf32, #tpu.memory_space<vmem>>, vector<8x2048xf32>
    tpu.vector_store %arg8[%c0_15, %c0_16], %28 {strides = array<i32>} : memref<8x2048xf32, #tpu.memory_space<vmem>>, vector<8x2048xf32>,
    return
  }
  func.func @transform_0(%arg0: i32) -> (i32, i32) {
    %c0_i32 = arith.constant 0 : i32
    %c0_i32_0 = arith.constant 0 : i32
    return %c0_i32, %arg0 : i32, i32
  }
  func.func @transform_1(%arg0: i32) -> (i32, i32) {
    %c0_i32 = arith.constant 0 : i32
    %c0_i32_0 = arith.constant 0 : i32
    %c0_i32_1 = arith.constant 0 : i32
    return %c0_i32, %c0_i32_0 : i32, i32
  }
  func.func @transform_2(%arg0: i32) -> (i32, i32) {
    %c0_i32 = arith.constant 0 : i32
    %c0_i32_0 = arith.constant 0 : i32
    %c0_i32_1 = arith.constant 0 : i32
    return %c0_i32, %c0_i32_0 : i32, i32
  }
  func.func @transform_3(%arg0: i32) -> (i32, i32) {
    %c0_i32 = arith.constant 0 : i32
    %c0_i32_0 = arith.constant 0 : i32
    %c0_i32_1 = arith.constant 0 : i32
    return %c0_i32, %c0_i32_0 : i32, i32
  }
  func.func @transform_4(%arg0: i32) -> (i32, i32) {
    %c0_i32 = arith.constant 0 : i32
    %c0_i32_0 = arith.constant 0 : i32
    %c0_i32_1 = arith.constant 0 : i32
    return %c0_i32, %c0_i32_0 : i32, i32
  }
  func.func @transform_5(%arg0: i32) -> (i32, i32) {
    %c0_i32 = arith.constant 0 : i32
    %c0_i32_0 = arith.constant 0 : i32
    %c0_i32_1 = arith.constant 0 : i32
    return %c0_i32, %c0_i32_0 : i32, i32
  }
  func.func @transform_6(%arg0: i32) -> (i32, i32) {
    %c0_i32 = arith.constant 0 : i32
    %c0_i32_0 = arith.constant 0 : i32
    %c0_i32_1 = arith.constant 0 : i32
    return %c0_i32, %c0_i32_0 : i32, i32
  }
  func.func @transform_7(%arg0: i32) -> (i32, i32) {
    %c0_i32 = arith.constant 0 : i32
    %c0_i32_0 = arith.constant 0 : i32
    return %c0_i32, %arg0 : i32, i32
  }
}

</mosaic_0001>

<llo_original>
// kernel: tpu_custom_call.1
$region0: #{tpu_custom_call.1}
  #allocation0 [shape = 'u32[]', space=smem, size = 0x4, offset = 0x4, fixed_abs, tag = 'smem constant byte address 0x4 - core index']
  #allocation1 [shape = 'u32[72,128]{1,0:T(1,128)}', space=vmem, size = 0x9000, scoped, tag = 'internal scratch']
  %s0 = inlined_call_operand.vmem [shape: f32[2,2048], index: 0, kind: input, shape index: {}]
  %s1 = inlined_call_operand.vmem [shape: f32[32,2], index: 1, kind: input, shape index: {}]
  %s2 = inlined_call_operand.vmem [shape: f32[32,1], index: 2, kind: input, shape index: {}]
  %s3 = inlined_call_operand.vmem [shape: bf16[32,32], index: 3, kind: input, shape index: {}]
  %s4 = inlined_call_operand.vmem [shape: f32[32,1], index: 4, kind: input, shape index: {}]
  %s5 = inlined_call_operand.vmem [shape: bf16[8,32], index: 5, kind: input, shape index: {}]
  %s6 = inlined_call_operand.vmem [shape: f32[8,1], index: 6, kind: input, shape index: {}]
  %s7 = inlined_call_operand.hbm [shape: f32[8,2048], index: 7, kind: output, shape index: {}]
  %s8 = sld [smem:[#allocation0]]
  $region38: #{tpu_custom_call.1} parent=0
    _
  %s10 = ssub.s32 1, %s8
  %s11 = scalar_select 0, %s10, %s8
  $region1: #{tpu_custom_call.1} parent=0
    #allocation2 [shape = 'u8[65536]{0}', space=vmem, size = 0x10000, scoped, tag = 'output window, operand 0, single buffered']
    #allocation3 [shape = 's32[1]{0}', space=sflag, size = 0x4, scoped, tag = 'scoped memory for tpu_custom_call.1']
    %12 = vsyncpa [#allocation3], 0
    // Predicated region
    $region2: #{tpu_custom_call.1} parent=1 // pred_check
      _
    $region3: #{tpu_custom_call.1} parent=1 // pred_check_branch
      %14 = sbr.rel (0) target = $region5
    $region4: #{tpu_custom_call.1} parent=1 // pred_region
      _
    $region5: #{tpu_custom_call.1} parent=1 // pred_fallthru
      _
    // Predicated region
    $region6: #{tpu_custom_call.1} parent=1 // pred_check
      _
    $region7: #{tpu_custom_call.1} parent=1 // pred_check_branch
      %16 = sbr.rel (0) target = $region9
    $region8: #{tpu_custom_call.1} parent=1 // pred_region
      _
    $region9: #{tpu_custom_call.1} parent=1 // pred_fallthru
      _
    // Predicated region
    $region10: #{tpu_custom_call.1} parent=1 // pred_check
      _
    $region11: #{tpu_custom_call.1} parent=1 // pred_check_branch
      %18 = sbr.rel (0) target = $region13
    $region12: #{tpu_custom_call.1} parent=1 // pred_region
      _
    $region13: #{tpu_custom_call.1} parent=1 // pred_fallthru
      _
    // Predicated region
    $region14: #{tpu_custom_call.1} parent=1 // pred_check
      _
    $region15: #{tpu_custom_call.1} parent=1 // pred_check_branch
      %20 = sbr.rel (0) target = $region17
    $region16: #{tpu_custom_call.1} parent=1 // pred_region
      _
    $region17: #{tpu_custom_call.1} parent=1 // pred_fallthru
      _
    // Predicated region
    $region18: #{tpu_custom_call.1} parent=1 // pred_check
      _
    $region19: #{tpu_custom_call.1} parent=1 // pred_check_branch
      %22 = sbr.rel (0) target = $region21
    $region20: #{tpu_custom_call.1} parent=1 // pred_region
      _
    $region21: #{tpu_custom_call.1} parent=1 // pred_fallthru
      _
    // Predicated region
    $region22: #{tpu_custom_call.1} parent=1 // pred_check
      _
    $region23: #{tpu_custom_call.1} parent=1 // pred_check_branch
      %24 = sbr.rel (0) target = $region25
    $region24: #{tpu_custom_call.1} parent=1 // pred_region
      _
    $region25: #{tpu_custom_call.1} parent=1 // pred_fallthru
      _
    // Predicated region
    $region26: #{tpu_custom_call.1} parent=1 // pred_check
      _
    $region27: #{tpu_custom_call.1} parent=1 // pred_check_branch
      %26 = sbr.rel (0) target = $region29
    $region28: #{tpu_custom_call.1} parent=1 // pred_region
      _
    $region29: #{tpu_custom_call.1} parent=1 // pred_fallthru
      _
    %v28 = vld [vmem:[%s0] ss:$2 sm:$0xff]
    %s29 = scalar_lea.vmem %s0, 16
    %v30 = vld [vmem:[%s29] ss:$2 sm:$0xff]
    %s31 = scalar_lea.vmem %s0, 1
    %v32 = vld [vmem:[%s31] ss:$2 sm:$0xff]
    %s33 = scalar_lea.vmem %s0, 17
    %v34 = vld [vmem:[%s33] ss:$2 sm:$0xff]
    %v35 = vld [vmem:[%s1] sm:$0xff]
    %v36 = vld [vmem:[%s1 + $0x8] sm:$0xff]
    %v37 = vld [vmem:[%s1 + $0x10] sm:$0xff]
    %v38 = vld [vmem:[%s1 + $0x18] sm:$0xff]
    %40 = vset.pattern.permute.xlu0 0
    %41 = vperm.xlu0 %40, %v35
    %v42 = vpop.permute.xlu0 %41
    %45 = vset.pattern.permute.xlu0 0
    %46 = vperm.xlu0 %45, %v36
    %v47 = vpop.permute.xlu0 %46
    %50 = vset.pattern.permute.xlu0 0
    %51 = vperm.xlu0 %50, %v37
    %v52 = vpop.permute.xlu0 %51
    %55 = vset.pattern.permute.xlu0 0
    %56 = vperm.xlu0 %55, %v38
    %v57 = vpop.permute.xlu0 %56
    %v61 = vperm.slane %v28, 0
    %v62 = vperm.slane %v28, 1
    %v63 = vperm.slane %v28, 2
    %v64 = vperm.slane %v28, 3
    %v65 = vperm.slane %v28, 4
    %v66 = vperm.slane %v28, 5
    %v67 = vperm.slane %v28, 6
    %v68 = vperm.slane %v28, 7
    %v69 = vperm.slane %v30, 0
    %v70 = vperm.slane %v30, 1
    %v71 = vperm.slane %v30, 2
    %v72 = vperm.slane %v30, 3
    %v73 = vperm.slane %v30, 4
    %v74 = vperm.slane %v30, 5
    %v75 = vperm.slane %v30, 6
    %v76 = vperm.slane %v30, 7
    %v93 = vmul.f32 %v42, %v61
    %v94 = vmul.f32 %v42, %v62
    %v95 = vmul.f32 %v42, %v63
    %v96 = vmul.f32 %v42, %v64
    %v97 = vmul.f32 %v42, %v65
    %v98 = vmul.f32 %v42, %v66
    %v99 = vmul.f32 %v42, %v67
    %v100 = vmul.f32 %v42, %v68
    %v101 = vmul.f32 %v42, %v69
    %v102 = vmul.f32 %v42, %v70
    %v103 = vmul.f32 %v42, %v71
    %v104 = vmul.f32 %v42, %v72
    %v105 = vmul.f32 %v42, %v73
    %v106 = vmul.f32 %v42, %v74
    %v107 = vmul.f32 %v42, %v75
    %v108 = vmul.f32 %v42, %v76
    %v109 = vmul.f32 %v47, %v61
    %v110 = vmul.f32 %v47, %v62
    %v111 = vmul.f32 %v47, %v63
    %v112 = vmul.f32 %v47, %v64
    %v113 = vmul.f32 %v47, %v65
    %v114 = vmul.f32 %v47, %v66
    %v115 = vmul.f32 %v47, %v67
    %v116 = vmul.f32 %v47, %v68
    %v117 = vmul.f32 %v47, %v69
    %v118 = vmul.f32 %v47, %v70
    %v119 = vmul.f32 %v47, %v71
    %v120 = vmul.f32 %v47, %v72
    %v121 = vmul.f32 %v47, %v73
    %v122 = vmul.f32 %v47, %v74
    %v123 = vmul.f32 %v47, %v75
    %v124 = vmul.f32 %v47, %v76
    %v125 = vmul.f32 %v52, %v61
    %v126 = vmul.f32 %v52, %v62
    %v127 = vmul.f32 %v52, %v63
    %v128 = vmul.f32 %v52, %v64
    %v129 = vmul.f32 %v52, %v65
    %v130 = vmul.f32 %v52, %v66
    %v131 = vmul.f32 %v52, %v67
    %v132 = vmul.f32 %v52, %v68
    %v133 = vmul.f32 %v52, %v69
    %v134 = vmul.f32 %v52, %v70
    %v135 = vmul.f32 %v52, %v71
    %v136 = vmul.f32 %v52, %v72
    %v137 = vmul.f32 %v52, %v73
    %v138 = vmul.f32 %v52, %v74
    %v139 = vmul.f32 %v52, %v75
    %v140 = vmul.f32 %v52, %v76
    %v141 = vmul.f32 %v57, %v61
    %v142 = vmul.f32 %v57, %v62
    %v143 = vmul.f32 %v57, %v63
    %v144 = vmul.f32 %v57, %v64
    %v145 = vmul.f32 %v57, %v65
    %v146 = vmul.f32 %v57, %v66
    %v147 = vmul.f32 %v57, %v67
    %v148 = vmul.f32 %v57, %v68
    %v149 = vmul.f32 %v57, %v69
    %v150 = vmul.f32 %v57, %v70
    %v151 = vmul.f32 %v57, %v71
    %v152 = vmul.f32 %v57, %v72
    %v153 = vmul.f32 %v57, %v73
    %v154 = vmul.f32 %v57, %v74
    %v155 = vmul.f32 %v57, %v75
    %v156 = vmul.f32 %v57, %v76
    %157 = vset.pattern.permute.xlu0 1
    %158 = vperm.xlu0 %157, %v35
    %v159 = vpop.permute.xlu0 %158
    %161 = vset.pattern.permute.xlu0 1
    %162 = vperm.xlu0 %161, %v36
    %v163 = vpop.permute.xlu0 %162
    %165 = vset.pattern.permute.xlu0 1
    %166 = vperm.xlu0 %165, %v37
    %v167 = vpop.permute.xlu0 %166
    %169 = vset.pattern.permute.xlu0 1
    %170 = vperm.xlu0 %169, %v38
    %v171 = vpop.permute.xlu0 %170
    %v175 = vperm.slane %v32, 0
    %v176 = vperm.slane %v32, 1
    %v177 = vperm.slane %v32, 2
    %v178 = vperm.slane %v32, 3
    %v179 = vperm.slane %v32, 4
    %v180 = vperm.slane %v32, 5
    %v181 = vperm.slane %v32, 6
    %v182 = vperm.slane %v32, 7
    %v183 = vperm.slane %v34, 0
    %v184 = vperm.slane %v34, 1
    %v185 = vperm.slane %v34, 2
    %v186 = vperm.slane %v34, 3
    %v187 = vperm.slane %v34, 4
    %v188 = vperm.slane %v34, 5
    %v189 = vperm.slane %v34, 6
    %v190 = vperm.slane %v34, 7
    %v207 = vmul.f32 %v159, %v175
    %v208 = vmul.f32 %v159, %v176
    %v209 = vmul.f32 %v159, %v177
    %v210 = vmul.f32 %v159, %v178
    %v211 = vmul.f32 %v159, %v179
    %v212 = vmul.f32 %v159, %v180
    %v213 = vmul.f32 %v159, %v181
    %v214 = vmul.f32 %v159, %v182
    %v215 = vmul.f32 %v159, %v183
    %v216 = vmul.f32 %v159, %v184
    %v217 = vmul.f32 %v159, %v185
    %v218 = vmul.f32 %v159, %v186
    %v219 = vmul.f32 %v159, %v187
    %v220 = vmul.f32 %v159, %v188
    %v221 = vmul.f32 %v159, %v189
    %v222 = vmul.f32 %v159, %v190
    %v223 = vmul.f32 %v163, %v175
    %v224 = vmul.f32 %v163, %v176
    %v225 = vmul.f32 %v163, %v177
    %v226 = vmul.f32 %v163, %v178
    %v227 = vmul.f32 %v163, %v179
    %v228 = vmul.f32 %v163, %v180
    %v229 = vmul.f32 %v163, %v181
    %v230 = vmul.f32 %v163, %v182
    %v231 = vmul.f32 %v163, %v183
    %v232 = vmul.f32 %v163, %v184
    %v233 = vmul.f32 %v163, %v185
    %v234 = vmul.f32 %v163, %v186
    %v235 = vmul.f32 %v163, %v187
    %v236 = vmul.f32 %v163, %v188
    %v237 = vmul.f32 %v163, %v189
    %v238 = vmul.f32 %v163, %v190
    %v239 = vmul.f32 %v167, %v175
    %v240 = vmul.f32 %v167, %v176
    %v241 = vmul.f32 %v167, %v177
    %v242 = vmul.f32 %v167, %v178
    %v243 = vmul.f32 %v167, %v179
    %v244 = vmul.f32 %v167, %v180
    %v245 = vmul.f32 %v167, %v181
    %v246 = vmul.f32 %v167, %v182
    %v247 = vmul.f32 %v167, %v183
    %v248 = vmul.f32 %v167, %v184
    %v249 = vmul.f32 %v167, %v185
    %v250 = vmul.f32 %v167, %v186
    %v251 = vmul.f32 %v167, %v187
    %v252 = vmul.f32 %v167, %v188
    %v253 = vmul.f32 %v167, %v189
    %v254 = vmul.f32 %v167, %v190
    %v255 = vmul.f32 %v171, %v175
    %v256 = vmul.f32 %v171, %v176
    %v257 = vmul.f32 %v171, %v177
    %v258 = vmul.f32 %v171, %v178
    %v259 = vmul.f32 %v171, %v179
    %v260 = vmul.f32 %v171, %v180
    %v261 = vmul.f32 %v171, %v181
    %v262 = vmul.f32 %v171, %v182
    %v263 = vmul.f32 %v171, %v183
    %v264 = vmul.f32 %v171, %v184
    %v265 = vmul.f32 %v171, %v185
    %v266 = vmul.f32 %v171, %v186
    %v267 = vmul.f32 %v171, %v187
    %v268 = vmul.f32 %v171, %v188
    %v269 = vmul.f32 %v171, %v189
    %v270 = vmul.f32 %v171, %v190
    %v271 = vadd.f32 %v93, %v207
    %v272 = vadd.f32 %v94, %v208
    %v273 = vadd.f32 %v95, %v209
    %v274 = vadd.f32 %v96, %v210
    %v275 = vadd.f32 %v97, %v211
    %v276 = vadd.f32 %v98, %v212
    %v277 = vadd.f32 %v99, %v213
    %v278 = vadd.f32 %v100, %v214
    %v279 = vadd.f32 %v101, %v215
    %v280 = vadd.f32 %v102, %v216
    %v281 = vadd.f32 %v103, %v217
    %v282 = vadd.f32 %v104, %v218
    %v283 = vadd.f32 %v105, %v219
    %v284 = vadd.f32 %v106, %v220
    %v285 = vadd.f32 %v107, %v221
    %v286 = vadd.f32 %v108, %v222
    %v287 = vadd.f32 %v109, %v223
    %v288 = vadd.f32 %v110, %v224
    %v289 = vadd.f32 %v111, %v225
    %v290 = vadd.f32 %v112, %v226
    %v291 = vadd.f32 %v113, %v227
    %v292 = vadd.f32 %v114, %v228
    %v293 = vadd.f32 %v115, %v229
    %v294 = vadd.f32 %v116, %v230
    %v295 = vadd.f32 %v117, %v231
    %v296 = vadd.f32 %v118, %v232
    %v297 = vadd.f32 %v119, %v233
    %v298 = vadd.f32 %v120, %v234
    %v299 = vadd.f32 %v121, %v235
    %v300 = vadd.f32 %v122, %v236
    %v301 = vadd.f32 %v123, %v237
    %v302 = vadd.f32 %v124, %v238
    %v303 = vadd.f32 %v125, %v239
    %v304 = vadd.f32 %v126, %v240
    %v305 = vadd.f32 %v127, %v241
    %v306 = vadd.f32 %v128, %v242
    %v307 = vadd.f32 %v129, %v243
    %v308 = vadd.f32 %v130, %v244
    %v309 = vadd.f32 %v131, %v245
    %v310 = vadd.f32 %v132, %v246
    %v311 = vadd.f32 %v133, %v247
    %v312 = vadd.f32 %v134, %v248
    %v313 = vadd.f32 %v135, %v249
    %v314 = vadd.f32 %v136, %v250
    %v315 = vadd.f32 %v137, %v251
    %v316 = vadd.f32 %v138, %v252
    %v317 = vadd.f32 %v139, %v253
    %v318 = vadd.f32 %v140, %v254
    %v319 = vadd.f32 %v141, %v255
    %v320 = vadd.f32 %v142, %v256
    %v321 = vadd.f32 %v143, %v257
    %v322 = vadd.f32 %v144, %v258
    %v323 = vadd.f32 %v145, %v259
    %v324 = vadd.f32 %v146, %v260
    %v325 = vadd.f32 %v147, %v261
    %v326 = vadd.f32 %v148, %v262
    %v327 = vadd.f32 %v149, %v263
    %v328 = vadd.f32 %v150, %v264
    %v329 = vadd.f32 %v151, %v265
    %v330 = vadd.f32 %v152, %v266
    %v331 = vadd.f32 %v153, %v267
    %v332 = vadd.f32 %v154, %v268
    %v333 = vadd.f32 %v155, %v269
    %v334 = vadd.f32 %v156, %v270
    %v335 = vld [vmem:[%s2] sm:$0xff]
    %v336 = vld [vmem:[%s2 + $0x8] sm:$0xff]
    %v337 = vld [vmem:[%s2 + $0x10] sm:$0xff]
    %v338 = vld [vmem:[%s2 + $0x18] sm:$0xff]
    %340 = vset.pattern.permute.xlu0 0
    %341 = vperm.xlu0 %340, %v335
    %v342 = vpop.permute.xlu0 %341
    %345 = vset.pattern.permute.xlu0 0
    %346 = vperm.xlu0 %345, %v336
    %v347 = vpop.permute.xlu0 %346
    %350 = vset.pattern.permute.xlu0 0
    %351 = vperm.xlu0 %350, %v337
    %v352 = vpop.permute.xlu0 %351
    %355 = vset.pattern.permute.xlu0 0
    %356 = vperm.xlu0 %355, %v338
    %v357 = vpop.permute.xlu0 %356
    %v359 = vadd.f32 %v271, %v342
    %v360 = vadd.f32 %v272, %v342
    %v361 = vadd.f32 %v273, %v342
    %v362 = vadd.f32 %v274, %v342
    %v363 = vadd.f32 %v275, %v342
    %v364 = vadd.f32 %v276, %v342
    %v365 = vadd.f32 %v277, %v342
    %v366 = vadd.f32 %v278, %v342
    %v367 = vadd.f32 %v279, %v342
    %v368 = vadd.f32 %v280, %v342
    %v369 = vadd.f32 %v281, %v342
    %v370 = vadd.f32 %v282, %v342
    %v371 = vadd.f32 %v283, %v342
    %v372 = vadd.f32 %v284, %v342
    %v373 = vadd.f32 %v285, %v342
    %v374 = vadd.f32 %v286, %v342
    %v375 = vadd.f32 %v287, %v347
    %v376 = vadd.f32 %v288, %v347
    %v377 = vadd.f32 %v289, %v347
    %v378 = vadd.f32 %v290, %v347
    %v379 = vadd.f32 %v291, %v347
    %v380 = vadd.f32 %v292, %v347
    %v381 = vadd.f32 %v293, %v347
    %v382 = vadd.f32 %v294, %v347
    %v383 = vadd.f32 %v295, %v347
    %v384 = vadd.f32 %v296, %v347
    %v385 = vadd.f32 %v297, %v347
    %v386 = vadd.f32 %v298, %v347
    %v387 = vadd.f32 %v299, %v347
    %v388 = vadd.f32 %v300, %v347
    %v389 = vadd.f32 %v301, %v347
    %v390 = vadd.f32 %v302, %v347
    %v391 = vadd.f32 %v303, %v352
    %v392 = vadd.f32 %v304, %v352
    %v393 = vadd.f32 %v305, %v352
    %v394 = vadd.f32 %v306, %v352
    %v395 = vadd.f32 %v307, %v352
    %v396 = vadd.f32 %v308, %v352
    %v397 = vadd.f32 %v309, %v352
    %v398 = vadd.f32 %v310, %v352
    %v399 = vadd.f32 %v311, %v352
    %v400 = vadd.f32 %v312, %v352
    %v401 = vadd.f32 %v313, %v352
    %v402 = vadd.f32 %v314, %v352
    %v403 = vadd.f32 %v315, %v352
    %v404 = vadd.f32 %v316, %v352
    %v405 = vadd.f32 %v317, %v352
    %v406 = vadd.f32 %v318, %v352
    %v407 = vadd.f32 %v319, %v357
    %v408 = vadd.f32 %v320, %v357
    %v409 = vadd.f32 %v321, %v357
    %v410 = vadd.f32 %v322, %v357
    %v411 = vadd.f32 %v323, %v357
    %v412 = vadd.f32 %v324, %v357
    %v413 = vadd.f32 %v325, %v357
    %v414 = vadd.f32 %v326, %v357
    %v415 = vadd.f32 %v327, %v357
    %v416 = vadd.f32 %v328, %v357
    %v417 = vadd.f32 %v329, %v357
    %v418 = vadd.f32 %v330, %v357
    %v419 = vadd.f32 %v331, %v357
    %v420 = vadd.f32 %v332, %v357
    %v421 = vadd.f32 %v333, %v357
    %v422 = vadd.f32 %v334, %v357
    %v423 = vtanh.pop %v359
    %v424 = vtanh.pop %v360
    %v425 = vtanh.pop %v361
    %v426 = vtanh.pop %v362
    %v427 = vtanh.pop %v363
    %v428 = vtanh.pop %v364
    %v429 = vtanh.pop %v365
    %v430 = vtanh.pop %v366
    %v431 = vtanh.pop %v367
    %v432 = vtanh.pop %v368
    %v433 = vtanh.pop %v369
    %v434 = vtanh.pop %v370
    %v435 = vtanh.pop %v371
    %v436 = vtanh.pop %v372
    %v437 = vtanh.pop %v373
    %v438 = vtanh.pop %v374
    %v439 = vtanh.pop %v375
    %v440 = vtanh.pop %v376
    %v441 = vtanh.pop %v377
    %v442 = vtanh.pop %v378
    %v443 = vtanh.pop %v379
    %v444 = vtanh.pop %v380
    %v445 = vtanh.pop %v381
    %v446 = vtanh.pop %v382
    %v447 = vtanh.pop %v383
    %v448 = vtanh.pop %v384
    %v449 = vtanh.pop %v385
    %v450 = vtanh.pop %v386
    %v451 = vtanh.pop %v387
    %v452 = vtanh.pop %v388
    %v453 = vtanh.pop %v389
    %v454 = vtanh.pop %v390
    %v455 = vtanh.pop %v391
    %v456 = vtanh.pop %v392
    %v457 = vtanh.pop %v393
    %v458 = vtanh.pop %v394
    %v459 = vtanh.pop %v395
    %v460 = vtanh.pop %v396
    %v461 = vtanh.pop %v397
    %v462 = vtanh.pop %v398
    %v463 = vtanh.pop %v399
    %v464 = vtanh.pop %v400
    %v465 = vtanh.pop %v401
    %v466 = vtanh.pop %v402
    %v467 = vtanh.pop %v403
    %v468 = vtanh.pop %v404
    %v469 = vtanh.pop %v405
    %v470 = vtanh.pop %v406
    %v471 = vtanh.pop %v407
    %v472 = vtanh.pop %v408
    %v473 = vtanh.pop %v409
    %v474 = vtanh.pop %v410
    %v475 = vtanh.pop %v411
    %v476 = vtanh.pop %v412
    %v477 = vtanh.pop %v413
    %v478 = vtanh.pop %v414
    %v479 = vtanh.pop %v415
    %v480 = vtanh.pop %v416
    %v481 = vtanh.pop %v417
    %v482 = vtanh.pop %v418
    %v483 = vtanh.pop %v419
    %v484 = vtanh.pop %v420
    %v485 = vtanh.pop %v421
    %v486 = vtanh.pop %v422
    %v487 = vld [vmem:[%s3] sm:$0xf]
    %v488 = vld [vmem:[%s3 + $0x4] sm:$0xf]
    %v489 = vld [vmem:[%s3 + $0x8] sm:$0xf]
    %v490 = vld [vmem:[%s3 + $0xc] sm:$0xf]
    %v491 = vpack.c.bf16 %v439, %v423
    %v492 = vpack.c.bf16 %v440, %v424
    %v493 = vpack.c.bf16 %v441, %v425
    %v494 = vpack.c.bf16 %v442, %v426
    %v495 = vpack.c.bf16 %v443, %v427
    %v496 = vpack.c.bf16 %v444, %v428
    %v497 = vpack.c.bf16 %v445, %v429
    %v498 = vpack.c.bf16 %v446, %v430
    %v499 = vpack.c.bf16 %v447, %v431
    %v500 = vpack.c.bf16 %v448, %v432
    %v501 = vpack.c.bf16 %v449, %v433
    %v502 = vpack.c.bf16 %v450, %v434
    %v503 = vpack.c.bf16 %v451, %v435
    %v504 = vpack.c.bf16 %v452, %v436
    %v505 = vpack.c.bf16 %v453, %v437
    %v506 = vpack.c.bf16 %v454, %v438
    %v507 = vpack.c.bf16 %v471, %v455
    %v508 = vpack.c.bf16 %v472, %v456
    %v509 = vpack.c.bf16 %v473, %v457
    %v510 = vpack.c.bf16 %v474, %v458
    %v511 = vpack.c.bf16 %v475, %v459
    %v512 = vpack.c.bf16 %v476, %v460
    %v513 = vpack.c.bf16 %v477, %v461
    %v514 = vpack.c.bf16 %v478, %v462
    %v515 = vpack.c.bf16 %v479, %v463
    %v516 = vpack.c.bf16 %v480, %v464
    %v517 = vpack.c.bf16 %v481, %v465
    %v518 = vpack.c.bf16 %v482, %v466
    %v519 = vpack.c.bf16 %v483, %v467
    %v520 = vpack.c.bf16 %v484, %v468
    %v521 = vpack.c.bf16 %v485, %v469
    %v522 = vpack.c.bf16 %v486, %v470
    %v523 = vld [vmem:[%s4] sm:$0xff]
    %v524 = vld [vmem:[%s4 + $0x8] sm:$0xff]
    %v525 = vld [vmem:[%s4 + $0x10] sm:$0xff]
    %v526 = vld [vmem:[%s4 + $0x18] sm:$0xff]
    %528 = vset.pattern.permute.xlu0 0
    %529 = vperm.xlu0 %528, %v523
    %v530 = vpop.permute.xlu0 %529
    %533 = vset.pattern.permute.xlu0 0
    %534 = vperm.xlu0 %533, %v524
    %v535 = vpop.permute.xlu0 %534
    %538 = vset.pattern.permute.xlu0 0
    %539 = vperm.xlu0 %538, %v525
    %v540 = vpop.permute.xlu0 %539
    %543 = vset.pattern.permute.xlu0 0
    %544 = vperm.xlu0 %543, %v526
    %v545 = vpop.permute.xlu0 %544
    %v551 = vunpack.c.l.b16 %v487
    %v552 = vunpack.c.l.b16 %v488
    %v553 = vunpack.c.l.b16 %v489
    %v554 = vunpack.c.l.b16 %v490
    %v555 = vpack.c.b16 %v552, %v551
    %v556 = vpack.c.b16 %v554, %v553
    %vm557 = vcmask 261120
    %v559 = vsel %vm557, %v555, 0
    %v562 = vsel %vm557, %v556, 0
    %564 = vmatpush.bf16.msra.mxu0 0
    %565 = vmatpush.bf16.msra.mxu0 0
    %566 = vmatpush.bf16.msra.mxu0 0
    %567 = vmatpush.bf16.msra.mxu0 0
    %568 = vmatpush.bf16.msra.mxu0 0
    %569 = vmatpush.bf16.msra.mxu0 0
    %570 = vmatpush.bf16.msra.mxu0 %v507
    %571 = vmatpush.bf16.msra.mxu0 %v491
    %572 = vmatmul.bf16.gmra.mxu0 %v559
    %v573 = vpop.f32.mrf.mxu0
    %v574 = vadd.f32 %v530, %v573
    %v575 = vpop.f32.mrf.mxu0
    %v576 = vadd.f32 %v535, %v575
    %577 = vmatmul.bf16.gmra.mxu0 %v562
    %v578 = vpop.f32.mrf.mxu0
    %v579 = vadd.f32 %v540, %v578
    %v580 = vpop.f32.mrf.mxu0
    %v581 = vadd.f32 %v545, %v580
    %582 = vdwg.mxu0
    %583 = vmatpush.bf16.msra.mxu0 0
    %584 = vmatpush.bf16.msra.mxu0 0
    %585 = vmatpush.bf16.msra.mxu0 0
    %586 = vmatpush.bf16.msra.mxu0 0
    %587 = vmatpush.bf16.msra.mxu0 0
    %588 = vmatpush.bf16.msra.mxu0 0
    %589 = vmatpush.bf16.msra.mxu0 %v508
    %590 = vmatpush.bf16.msra.mxu0 %v492
    %591 = vmatmul.bf16.gmra.mxu0 %v559
    %v592 = vpop.f32.mrf.mxu0
    %v593 = vadd.f32 %v530, %v592
    %v594 = vpop.f32.mrf.mxu0
    %v595 = vadd.f32 %v535, %v594
    %596 = vmatmul.bf16.gmra.mxu0 %v562
    %v597 = vpop.f32.mrf.mxu0
    %v598 = vadd.f32 %v540, %v597
    %v599 = vpop.f32.mrf.mxu0
    %v600 = vadd.f32 %v545, %v599
    %601 = vdwg.mxu0
    %602 = vmatpush.bf16.msra.mxu0 0
    %603 = vmatpush.bf16.msra.mxu0 0
    %604 = vmatpush.bf16.msra.mxu0 0
    %605 = vmatpush.bf16.msra.mxu0 0
    %606 = vmatpush.bf16.msra.mxu0 0
    %607 = vmatpush.bf16.msra.mxu0 0
    %608 = vmatpush.bf16.msra.mxu0 %v509
    %609 = vmatpush.bf16.msra.mxu0 %v493
    %610 = vmatmul.bf16.gmra.mxu0 %v559
    %v611 = vpop.f32.mrf.mxu0
    %v612 = vadd.f32 %v530, %v611
    %v613 = vpop.f32.mrf.mxu0
    %v614 = vadd.f32 %v535, %v613
    %615 = vmatmul.bf16.gmra.mxu0 %v562
    %v616 = vpop.f32.mrf.mxu0
    %v617 = vadd.f32 %v540, %v616
    %v618 = vpop.f32.mrf.mxu0
    %v619 = vadd.f32 %v545, %v618
    %620 = vdwg.mxu0
    %621 = vmatpush.bf16.msra.mxu0 0
    %622 = vmatpush.bf16.msra.mxu0 0
    %623 = vmatpush.bf16.msra.mxu0 0
    %624 = vmatpush.bf16.msra.mxu0 0
    %625 = vmatpush.bf16.msra.mxu0 0
    %626 = vmatpush.bf16.msra.mxu0 0
    %627 = vmatpush.bf16.msra.mxu0 %v510
    %628 = vmatpush.bf16.msra.mxu0 %v494
    %629 = vmatmul.bf16.gmra.mxu0 %v559
    %v630 = vpop.f32.mrf.mxu0
    %v631 = vadd.f32 %v530, %v630
    %v632 = vpop.f32.mrf.mxu0
    %v633 = vadd.f32 %v535, %v632
    %634 = vmatmul.bf16.gmra.mxu0 %v562
    %v635 = vpop.f32.mrf.mxu0
    %v636 = vadd.f32 %v540, %v635
    %v637 = vpop.f32.mrf.mxu0
    %v638 = vadd.f32 %v545, %v637
    %639 = vdwg.mxu0
    %640 = vmatpush.bf16.msra.mxu0 0
    %641 = vmatpush.bf16.msra.mxu0 0
    %642 = vmatpush.bf16.msra.mxu0 0
    %643 = vmatpush.bf16.msra.mxu0 0
    %644 = vmatpush.bf16.msra.mxu0 0
    %645 = vmatpush.bf16.msra.mxu0 0
    %646 = vmatpush.bf16.msra.mxu0 %v511
    %647 = vmatpush.bf16.msra.mxu0 %v495
    %648 = vmatmul.bf16.gmra.mxu0 %v559
    %v649 = vpop.f32.mrf.mxu0
    %v650 = vadd.f32 %v530, %v649
    %v651 = vpop.f32.mrf.mxu0
    %v652 = vadd.f32 %v535, %v651
    %653 = vmatmul.bf16.gmra.mxu0 %v562
    %v654 = vpop.f32.mrf.mxu0
    %v655 = vadd.f32 %v540, %v654
    %v656 = vpop.f32.mrf.mxu0
    %v657 = vadd.f32 %v545, %v656
    %658 = vdwg.mxu0
    %659 = vmatpush.bf16.msra.mxu0 0
    %660 = vmatpush.bf16.msra.mxu0 0
    %661 = vmatpush.bf16.msra.mxu0 0
    %662 = vmatpush.bf16.msra.mxu0 0
    %663 = vmatpush.bf16.msra.mxu0 0
    %664 = vmatpush.bf16.msra.mxu0 0
    %665 = vmatpush.bf16.msra.mxu0 %v512
    %666 = vmatpush.bf16.msra.mxu0 %v496
    %667 = vmatmul.bf16.gmra.mxu0 %v559
    %v668 = vpop.f32.mrf.mxu0
    %v669 = vadd.f32 %v530, %v668
    %v670 = vpop.f32.mrf.mxu0
    %v671 = vadd.f32 %v535, %v670
    %672 = vmatmul.bf16.gmra.mxu0 %v562
    %v673 = vpop.f32.mrf.mxu0
    %v674 = vadd.f32 %v540, %v673
    %v675 = vpop.f32.mrf.mxu0
    %v676 = vadd.f32 %v545, %v675
    %677 = vdwg.mxu0
    %678 = vmatpush.bf16.msra.mxu0 0
    %679 = vmatpush.bf16.msra.mxu0 0
    %680 = vmatpush.bf16.msra.mxu0 0
    %681 = vmatpush.bf16.msra.mxu0 0
    %682 = vmatpush.bf16.msra.mxu0 0
    %683 = vmatpush.bf16.msra.mxu0 0
    %684 = vmatpush.bf16.msra.mxu0 %v513
    %685 = vmatpush.bf16.msra.mxu0 %v497
    %686 = vmatmul.bf16.gmra.mxu0 %v559
    %v687 = vpop.f32.mrf.mxu0
    %v688 = vadd.f32 %v530, %v687
    %v689 = vpop.f32.mrf.mxu0
    %v690 = vadd.f32 %v535, %v689
    %691 = vmatmul.bf16.gmra.mxu0 %v562
    %v692 = vpop.f32.mrf.mxu0
    %v693 = vadd.f32 %v540, %v692
    %v694 = vpop.f32.mrf.mxu0
    %v695 = vadd.f32 %v545, %v694
    %696 = vdwg.mxu0
    %697 = vmatpush.bf16.msra.mxu0 0
    %698 = vmatpush.bf16.msra.mxu0 0
    %699 = vmatpush.bf16.msra.mxu0 0
    %700 = vmatpush.bf16.msra.mxu0 0
    %701 = vmatpush.bf16.msra.mxu0 0
    %702 = vmatpush.bf16.msra.mxu0 0
    %703 = vmatpush.bf16.msra.mxu0 %v514
    %704 = vmatpush.bf16.msra.mxu0 %v498
    %705 = vmatmul.bf16.gmra.mxu0 %v559
    %v706 = vpop.f32.mrf.mxu0
    %v707 = vadd.f32 %v530, %v706
    %v708 = vpop.f32.mrf.mxu0
    %v709 = vadd.f32 %v535, %v708
    %710 = vmatmul.bf16.gmra.mxu0 %v562
    %v711 = vpop.f32.mrf.mxu0
    %v712 = vadd.f32 %v540, %v711
    %v713 = vpop.f32.mrf.mxu0
    %v714 = vadd.f32 %v545, %v713
    %715 = vdwg.mxu0
    %716 = vmatpush.bf16.msra.mxu0 0
    %717 = vmatpush.bf16.msra.mxu0 0
    %718 = vmatpush.bf16.msra.mxu0 0
    %719 = vmatpush.bf16.msra.mxu0 0
    %720 = vmatpush.bf16.msra.mxu0 0
    %721 = vmatpush.bf16.msra.mxu0 0
    %722 = vmatpush.bf16.msra.mxu0 %v515
    %723 = vmatpush.bf16.msra.mxu0 %v499
    %724 = vmatmul.bf16.gmra.mxu0 %v559
    %v725 = vpop.f32.mrf.mxu0
    %v726 = vadd.f32 %v530, %v725
    %v727 = vpop.f32.mrf.mxu0
    %v728 = vadd.f32 %v535, %v727
    %729 = vmatmul.bf16.gmra.mxu0 %v562
    %v730 = vpop.f32.mrf.mxu0
    %v731 = vadd.f32 %v540, %v730
    %v732 = vpop.f32.mrf.mxu0
    %v733 = vadd.f32 %v545, %v732
    %734 = vdwg.mxu0
    %735 = vmatpush.bf16.msra.mxu0 0
    %736 = vmatpush.bf16.msra.mxu0 0
    %737 = vmatpush.bf16.msra.mxu0 0
    %738 = vmatpush.bf16.msra.mxu0 0
    %739 = vmatpush.bf16.msra.mxu0 0
    %740 = vmatpush.bf16.msra.mxu0 0
    %741 = vmatpush.bf16.msra.mxu0 %v516
    %742 = vmatpush.bf16.msra.mxu0 %v500
    %743 = vmatmul.bf16.gmra.mxu0 %v559
    %v744 = vpop.f32.mrf.mxu0
    %v745 = vadd.f32 %v530, %v744
    %v746 = vpop.f32.mrf.mxu0
    %v747 = vadd.f32 %v535, %v746
    %748 = vmatmul.bf16.gmra.mxu0 %v562
    %v749 = vpop.f32.mrf.mxu0
    %v750 = vadd.f32 %v540, %v749
    %v751 = vpop.f32.mrf.mxu0
    %v752 = vadd.f32 %v545, %v751
    %753 = vdwg.mxu0
    %754 = vmatpush.bf16.msra.mxu0 0
    %755 = vmatpush.bf16.msra.mxu0 0
    %756 = vmatpush.bf16.msra.mxu0 0
    %757 = vmatpush.bf16.msra.mxu0 0
    %758 = vmatpush.bf16.msra.mxu0 0
    %759 = vmatpush.bf16.msra.mxu0 0
    %760 = vmatpush.bf16.msra.mxu0 %v517
    %761 = vmatpush.bf16.msra.mxu0 %v501
    %762 = vmatmul.bf16.gmra.mxu0 %v559
    %v763 = vpop.f32.mrf.mxu0
    %v764 = vadd.f32 %v530, %v763
    %v765 = vpop.f32.mrf.mxu0
    %v766 = vadd.f32 %v535, %v765
    %767 = vmatmul.bf16.gmra.mxu0 %v562
    %v768 = vpop.f32.mrf.mxu0
    %v769 = vadd.f32 %v540, %v768
    %v770 = vpop.f32.mrf.mxu0
    %v771 = vadd.f32 %v545, %v770
    %772 = vdwg.mxu0
    %773 = vmatpush.bf16.msra.mxu0 0
    %774 = vmatpush.bf16.msra.mxu0 0
    %775 = vmatpush.bf16.msra.mxu0 0
    %776 = vmatpush.bf16.msra.mxu0 0
    %777 = vmatpush.bf16.msra.mxu0 0
    %778 = vmatpush.bf16.msra.mxu0 0
    %779 = vmatpush.bf16.msra.mxu0 %v518
    %780 = vmatpush.bf16.msra.mxu0 %v502
    %781 = vmatmul.bf16.gmra.mxu0 %v559
    %v782 = vpop.f32.mrf.mxu0
    %v783 = vadd.f32 %v530, %v782
    %v784 = vpop.f32.mrf.mxu0
    %v785 = vadd.f32 %v535, %v784
    %786 = vmatmul.bf16.gmra.mxu0 %v562
    %v787 = vpop.f32.mrf.mxu0
    %v788 = vadd.f32 %v540, %v787
    %v789 = vpop.f32.mrf.mxu0
    %v790 = vadd.f32 %v545, %v789
    %791 = vdwg.mxu0
    %792 = vmatpush.bf16.msra.mxu0 0
    %793 = vmatpush.bf16.msra.mxu0 0
    %794 = vmatpush.bf16.msra.mxu0 0
    %795 = vmatpush.bf16.msra.mxu0 0
    %796 = vmatpush.bf16.msra.mxu0 0
    %797 = vmatpush.bf16.msra.mxu0 0
    %798 = vmatpush.bf16.msra.mxu0 %v519
    %799 = vmatpush.bf16.msra.mxu0 %v503
    %800 = vmatmul.bf16.gmra.mxu0 %v559
    %v801 = vpop.f32.mrf.mxu0
    %v802 = vadd.f32 %v530, %v801
    %v803 = vpop.f32.mrf.mxu0
    %v804 = vadd.f32 %v535, %v803
    %805 = vmatmul.bf16.gmra.mxu0 %v562
    %v806 = vpop.f32.mrf.mxu0
    %v807 = vadd.f32 %v540, %v806
    %v808 = vpop.f32.mrf.mxu0
    %v809 = vadd.f32 %v545, %v808
    %810 = vdwg.mxu0
    %811 = vmatpush.bf16.msra.mxu0 0
    %812 = vmatpush.bf16.msra.mxu0 0
    %813 = vmatpush.bf16.msra.mxu0 0
    %814 = vmatpush.bf16.msra.mxu0 0
    %815 = vmatpush.bf16.msra.mxu0 0
    %816 = vmatpush.bf16.msra.mxu0 0
    %817 = vmatpush.bf16.msra.mxu0 %v520
    %818 = vmatpush.bf16.msra.mxu0 %v504
    %819 = vmatmul.bf16.gmra.mxu0 %v559
    %v820 = vpop.f32.mrf.mxu0
    %v821 = vadd.f32 %v530, %v820
    %v822 = vpop.f32.mrf.mxu0
    %v823 = vadd.f32 %v535, %v822
    %824 = vmatmul.bf16.gmra.mxu0 %v562
    %v825 = vpop.f32.mrf.mxu0
    %v826 = vadd.f32 %v540, %v825
    %v827 = vpop.f32.mrf.mxu0
    %v828 = vadd.f32 %v545, %v827
    %829 = vdwg.mxu0
    %830 = vmatpush.bf16.msra.mxu0 0
    %831 = vmatpush.bf16.msra.mxu0 0
    %832 = vmatpush.bf16.msra.mxu0 0
    %833 = vmatpush.bf16.msra.mxu0 0
    %834 = vmatpush.bf16.msra.mxu0 0
    %835 = vmatpush.bf16.msra.mxu0 0
    %836 = vmatpush.bf16.msra.mxu0 %v521
    %837 = vmatpush.bf16.msra.mxu0 %v505
    %838 = vmatmul.bf16.gmra.mxu0 %v559
    %v839 = vpop.f32.mrf.mxu0
    %v840 = vadd.f32 %v530, %v839
    %v841 = vpop.f32.mrf.mxu0
    %v842 = vadd.f32 %v535, %v841
    %843 = vmatmul.bf16.gmra.mxu0 %v562
    %v844 = vpop.f32.mrf.mxu0
    %v845 = vadd.f32 %v540, %v844
    %v846 = vpop.f32.mrf.mxu0
    %v847 = vadd.f32 %v545, %v846
    %848 = vdwg.mxu0
    %849 = vmatpush.bf16.msra.mxu0 0
    %850 = vmatpush.bf16.msra.mxu0 0
    %851 = vmatpush.bf16.msra.mxu0 0
    %852 = vmatpush.bf16.msra.mxu0 0
    %853 = vmatpush.bf16.msra.mxu0 0
    %854 = vmatpush.bf16.msra.mxu0 0
    %855 = vmatpush.bf16.msra.mxu0 %v522
    %856 = vmatpush.bf16.msra.mxu0 %v506
    %857 = vmatmul.bf16.gmra.mxu0 %v559
    %v858 = vpop.f32.mrf.mxu0
    %v859 = vadd.f32 %v530, %v858
    %v860 = vpop.f32.mrf.mxu0
    %v861 = vadd.f32 %v535, %v860
    %862 = vmatmul.bf16.gmra.mxu0 %v562
    %v863 = vpop.f32.mrf.mxu0
    %v864 = vadd.f32 %v540, %v863
    %v865 = vpop.f32.mrf.mxu0
    %v866 = vadd.f32 %v545, %v865
    %867 = vdwg.mxu0
    %v868 = vtanh.pop %v574
    %v869 = vtanh.pop %v593
    %v870 = vtanh.pop %v612
    %v871 = vtanh.pop %v631
    %v872 = vtanh.pop %v650
    %v873 = vtanh.pop %v669
    %v874 = vtanh.pop %v688
    %v875 = vtanh.pop %v707
    %v876 = vtanh.pop %v726
    %v877 = vtanh.pop %v745
    %v878 = vtanh.pop %v764
    %v879 = vtanh.pop %v783
    %v880 = vtanh.pop %v802
    %v881 = vtanh.pop %v821
    %v882 = vtanh.pop %v840
    %v883 = vtanh.pop %v859
    %v884 = vtanh.pop %v576
    %v885 = vtanh.pop %v595
    %v886 = vtanh.pop %v614
    %v887 = vtanh.pop %v633
    %v888 = vtanh.pop %v652
    %v889 = vtanh.pop %v671
    %v890 = vtanh.pop %v690
    %v891 = vtanh.pop %v709
    %v892 = vtanh.pop %v728
    %v893 = vtanh.pop %v747
    %v894 = vtanh.pop %v766
    %v895 = vtanh.pop %v785
    %v896 = vtanh.pop %v804
    %v897 = vtanh.pop %v823
    %v898 = vtanh.pop %v842
    %v899 = vtanh.pop %v861
    %v900 = vtanh.pop %v579
    %v901 = vtanh.pop %v598
    %v902 = vtanh.pop %v617
    %v903 = vtanh.pop %v636
    %v904 = vtanh.pop %v655
    %v905 = vtanh.pop %v674
    %v906 = vtanh.pop %v693
    %v907 = vtanh.pop %v712
    %v908 = vtanh.pop %v731
    %v909 = vtanh.pop %v750
    %v910 = vtanh.pop %v769
    %v911 = vtanh.pop %v788
    %v912 = vtanh.pop %v807
    %v913 = vtanh.pop %v826
    %v914 = vtanh.pop %v845
    %v915 = vtanh.pop %v864
    %v916 = vtanh.pop %v581
    %v917 = vtanh.pop %v600
    %v918 = vtanh.pop %v619
    %v919 = vtanh.pop %v638
    %v920 = vtanh.pop %v657
    %v921 = vtanh.pop %v676
    %v922 = vtanh.pop %v695
    %v923 = vtanh.pop %v714
    %v924 = vtanh.pop %v733
    %v925 = vtanh.pop %v752
    %v926 = vtanh.pop %v771
    %v927 = vtanh.pop %v790
    %v928 = vtanh.pop %v809
    %v929 = vtanh.pop %v828
    %v930 = vtanh.pop %v847
    %v931 = vtanh.pop %v866
    %v932 = vld [vmem:[%s5] sm:$0xf]
    %v933 = vpack.c.bf16 %v884, %v868
    %v934 = vpack.c.bf16 %v885, %v869
    %v935 = vpack.c.bf16 %v886, %v870
    %v936 = vpack.c.bf16 %v887, %v871
    %v937 = vpack.c.bf16 %v888, %v872
    %v938 = vpack.c.bf16 %v889, %v873
    %v939 = vpack.c.bf16 %v890, %v874
    %v940 = vpack.c.bf16 %v891, %v875
    %v941 = vpack.c.bf16 %v892, %v876
    %v942 = vpack.c.bf16 %v893, %v877
    %v943 = vpack.c.bf16 %v894, %v878
    %v944 = vpack.c.bf16 %v895, %v879
    %v945 = vpack.c.bf16 %v896, %v880
    %v946 = vpack.c.bf16 %v897, %v881
    %v947 = vpack.c.bf16 %v898, %v882
    %v948 = vpack.c.bf16 %v899, %v883
    %v949 = vpack.c.bf16 %v916, %v900
    %v950 = vpack.c.bf16 %v917, %v901
    %v951 = vpack.c.bf16 %v918, %v902
    %v952 = vpack.c.bf16 %v919, %v903
    %v953 = vpack.c.bf16 %v920, %v904
    %v954 = vpack.c.bf16 %v921, %v905
    %v955 = vpack.c.bf16 %v922, %v906
    %v956 = vpack.c.bf16 %v923, %v907
    %v957 = vpack.c.bf16 %v924, %v908
    %v958 = vpack.c.bf16 %v925, %v909
    %v959 = vpack.c.bf16 %v926, %v910
    %v960 = vpack.c.bf16 %v927, %v911
    %v961 = vpack.c.bf16 %v928, %v912
    %v962 = vpack.c.bf16 %v929, %v913
    %v963 = vpack.c.bf16 %v930, %v914
    %v964 = vpack.c.bf16 %v931, %v915
    %v965 = vld [vmem:[%s6] sm:$0xff]
    %967 = vset.pattern.permute.xlu0 0
    %968 = vperm.xlu0 %967, %v965
    %v969 = vpop.permute.xlu0 %968
    %v972 = vsel %vm557, %v932, 0
    %974 = vmatpush.bf16.msra.mxu0 0
    %975 = vmatpush.bf16.msra.mxu0 0
    %976 = vmatpush.bf16.msra.mxu0 0
    %977 = vmatpush.bf16.msra.mxu0 0
    %978 = vmatpush.bf16.msra.mxu0 0
    %979 = vmatpush.bf16.msra.mxu0 0
    %980 = vmatpush.bf16.msra.mxu0 %v949
    %981 = vmatpush.bf16.msra.mxu0 %v933
    %982 = vmatmul.bf16.gmra.mxu0 %v972
    %v983 = vpop.f32.mrf.mxu0
    %v984 = vadd.f32 %v969, %v983
    %v985 = vpop.f32.mrf.mxu0
    %986 = vdwg.mxu0
    %987 = vmatpush.bf16.msra.mxu0 0
    %988 = vmatpush.bf16.msra.mxu0 0
    %989 = vmatpush.bf16.msra.mxu0 0
    %990 = vmatpush.bf16.msra.mxu0 0
    %991 = vmatpush.bf16.msra.mxu0 0
    %992 = vmatpush.bf16.msra.mxu0 0
    %993 = vmatpush.bf16.msra.mxu0 %v950
    %994 = vmatpush.bf16.msra.mxu0 %v934
    %995 = vmatmul.bf16.gmra.mxu0 %v972
    %v996 = vpop.f32.mrf.mxu0
    %v997 = vadd.f32 %v969, %v996
    %v998 = vpop.f32.mrf.mxu0
    %999 = vdwg.mxu0
    %1000 = vmatpush.bf16.msra.mxu0 0
    %1001 = vmatpush.bf16.msra.mxu0 0
    %1002 = vmatpush.bf16.msra.mxu0 0
    %1003 = vmatpush.bf16.msra.mxu0 0
    %1004 = vmatpush.bf16.msra.mxu0 0
    %1005 = vmatpush.bf16.msra.mxu0 0
    %1006 = vmatpush.bf16.msra.mxu0 %v951
    %1007 = vmatpush.bf16.msra.mxu0 %v935
    %1008 = vmatmul.bf16.gmra.mxu0 %v972
    %v1009 = vpop.f32.mrf.mxu0
    %v1010 = vadd.f32 %v969, %v1009
    %v1011 = vpop.f32.mrf.mxu0
    %1012 = vdwg.mxu0
    %1013 = vmatpush.bf16.msra.mxu0 0
    %1014 = vmatpush.bf16.msra.mxu0 0
    %1015 = vmatpush.bf16.msra.mxu0 0
    %1016 = vmatpush.bf16.msra.mxu0 0
    %1017 = vmatpush.bf16.msra.mxu0 0
    %1018 = vmatpush.bf16.msra.mxu0 0
    %1019 = vmatpush.bf16.msra.mxu0 %v952
    %1020 = vmatpush.bf16.msra.mxu0 %v936
    %1021 = vmatmul.bf16.gmra.mxu0 %v972
    %v1022 = vpop.f32.mrf.mxu0
    %v1023 = vadd.f32 %v969, %v1022
    %v1024 = vpop.f32.mrf.mxu0
    %1025 = vdwg.mxu0
    %1026 = vmatpush.bf16.msra.mxu0 0
    %1027 = vmatpush.bf16.msra.mxu0 0
    %1028 = vmatpush.bf16.msra.mxu0 0
    %1029 = vmatpush.bf16.msra.mxu0 0
    %1030 = vmatpush.bf16.msra.mxu0 0
    %1031 = vmatpush.bf16.msra.mxu0 0
    %1032 = vmatpush.bf16.msra.mxu0 %v953
    %1033 = vmatpush.bf16.msra.mxu0 %v937
    %1034 = vmatmul.bf16.gmra.mxu0 %v972
    %v1035 = vpop.f32.mrf.mxu0
    %v1036 = vadd.f32 %v969, %v1035
    %v1037 = vpop.f32.mrf.mxu0
    %1038 = vdwg.mxu0
    %1039 = vmatpush.bf16.msra.mxu0 0
    %1040 = vmatpush.bf16.msra.mxu0 0
    %1041 = vmatpush.bf16.msra.mxu0 0
    %1042 = vmatpush.bf16.msra.mxu0 0
    %1043 = vmatpush.bf16.msra.mxu0 0
    %1044 = vmatpush.bf16.msra.mxu0 0
    %1045 = vmatpush.bf16.msra.mxu0 %v954
    %1046 = vmatpush.bf16.msra.mxu0 %v938
    %1047 = vmatmul.bf16.gmra.mxu0 %v972
    %v1048 = vpop.f32.mrf.mxu0
    %v1049 = vadd.f32 %v969, %v1048
    %v1050 = vpop.f32.mrf.mxu0
    %1051 = vdwg.mxu0
    %1052 = vmatpush.bf16.msra.mxu0 0
    %1053 = vmatpush.bf16.msra.mxu0 0
    %1054 = vmatpush.bf16.msra.mxu0 0
    %1055 = vmatpush.bf16.msra.mxu0 0
    %1056 = vmatpush.bf16.msra.mxu0 0
    %1057 = vmatpush.bf16.msra.mxu0 0
    %1058 = vmatpush.bf16.msra.mxu0 %v955
    %1059 = vmatpush.bf16.msra.mxu0 %v939
    %1060 = vmatmul.bf16.gmra.mxu0 %v972
    %v1061 = vpop.f32.mrf.mxu0
    %v1062 = vadd.f32 %v969, %v1061
    %v1063 = vpop.f32.mrf.mxu0
    %1064 = vdwg.mxu0
    %1065 = vmatpush.bf16.msra.mxu0 0
    %1066 = vmatpush.bf16.msra.mxu0 0
    %1067 = vmatpush.bf16.msra.mxu0 0
    %1068 = vmatpush.bf16.msra.mxu0 0
    %1069 = vmatpush.bf16.msra.mxu0 0
    %1070 = vmatpush.bf16.msra.mxu0 0
    %1071 = vmatpush.bf16.msra.mxu0 %v956
    %1072 = vmatpush.bf16.msra.mxu0 %v940
    %1073 = vmatmul.bf16.gmra.mxu0 %v972
    %v1074 = vpop.f32.mrf.mxu0
    %v1075 = vadd.f32 %v969, %v1074
    %v1076 = vpop.f32.mrf.mxu0
    %1077 = vdwg.mxu0
    %1078 = vmatpush.bf16.msra.mxu0 0
    %1079 = vmatpush.bf16.msra.mxu0 0
    %1080 = vmatpush.bf16.msra.mxu0 0
    %1081 = vmatpush.bf16.msra.mxu0 0
    %1082 = vmatpush.bf16.msra.mxu0 0
    %1083 = vmatpush.bf16.msra.mxu0 0
    %1084 = vmatpush.bf16.msra.mxu0 %v957
    %1085 = vmatpush.bf16.msra.mxu0 %v941
    %1086 = vmatmul.bf16.gmra.mxu0 %v972
    %v1087 = vpop.f32.mrf.mxu0
    %v1088 = vadd.f32 %v969, %v1087
    %v1089 = vpop.f32.mrf.mxu0
    %1090 = vdwg.mxu0
    %1091 = vmatpush.bf16.msra.mxu0 0
    %1092 = vmatpush.bf16.msra.mxu0 0
    %1093 = vmatpush.bf16.msra.mxu0 0
    %1094 = vmatpush.bf16.msra.mxu0 0
    %1095 = vmatpush.bf16.msra.mxu0 0
    %1096 = vmatpush.bf16.msra.mxu0 0
    %1097 = vmatpush.bf16.msra.mxu0 %v958
    %1098 = vmatpush.bf16.msra.mxu0 %v942
    %1099 = vmatmul.bf16.gmra.mxu0 %v972
    %v1100 = vpop.f32.mrf.mxu0
    %v1101 = vadd.f32 %v969, %v1100
    %v1102 = vpop.f32.mrf.mxu0
    %1103 = vdwg.mxu0
    %1104 = vmatpush.bf16.msra.mxu0 0
    %1105 = vmatpush.bf16.msra.mxu0 0
    %1106 = vmatpush.bf16.msra.mxu0 0
    %1107 = vmatpush.bf16.msra.mxu0 0
    %1108 = vmatpush.bf16.msra.mxu0 0
    %1109 = vmatpush.bf16.msra.mxu0 0
    %1110 = vmatpush.bf16.msra.mxu0 %v959
    %1111 = vmatpush.bf16.msra.mxu0 %v943
    %1112 = vmatmul.bf16.gmra.mxu0 %v972
    %v1113 = vpop.f32.mrf.mxu0
    %v1114 = vadd.f32 %v969, %v1113
    %v1115 = vpop.f32.mrf.mxu0
    %1116 = vdwg.mxu0
    %1117 = vmatpush.bf16.msra.mxu0 0
    %1118 = vmatpush.bf16.msra.mxu0 0
    %1119 = vmatpush.bf16.msra.mxu0 0
    %1120 = vmatpush.bf16.msra.mxu0 0
    %1121 = vmatpush.bf16.msra.mxu0 0
    %1122 = vmatpush.bf16.msra.mxu0 0
    %1123 = vmatpush.bf16.msra.mxu0 %v960
    %1124 = vmatpush.bf16.msra.mxu0 %v944
    %1125 = vmatmul.bf16.gmra.mxu0 %v972
    %v1126 = vpop.f32.mrf.mxu0
    %v1127 = vadd.f32 %v969, %v1126
    %v1128 = vpop.f32.mrf.mxu0
    %1129 = vdwg.mxu0
    %1130 = vmatpush.bf16.msra.mxu0 0
    %1131 = vmatpush.bf16.msra.mxu0 0
    %1132 = vmatpush.bf16.msra.mxu0 0
    %1133 = vmatpush.bf16.msra.mxu0 0
    %1134 = vmatpush.bf16.msra.mxu0 0
    %1135 = vmatpush.bf16.msra.mxu0 0
    %1136 = vmatpush.bf16.msra.mxu0 %v961
    %1137 = vmatpush.bf16.msra.mxu0 %v945
    %1138 = vmatmul.bf16.gmra.mxu0 %v972
    %v1139 = vpop.f32.mrf.mxu0
    %v1140 = vadd.f32 %v969, %v1139
    %v1141 = vpop.f32.mrf.mxu0
    %1142 = vdwg.mxu0
    %1143 = vmatpush.bf16.msra.mxu0 0
    %1144 = vmatpush.bf16.msra.mxu0 0
    %1145 = vmatpush.bf16.msra.mxu0 0
    %1146 = vmatpush.bf16.msra.mxu0 0
    %1147 = vmatpush.bf16.msra.mxu0 0
    %1148 = vmatpush.bf16.msra.mxu0 0
    %1149 = vmatpush.bf16.msra.mxu0 %v962
    %1150 = vmatpush.bf16.msra.mxu0 %v946
    %1151 = vmatmul.bf16.gmra.mxu0 %v972
    %v1152 = vpop.f32.mrf.mxu0
    %v1153 = vadd.f32 %v969, %v1152
    %v1154 = vpop.f32.mrf.mxu0
    %1155 = vdwg.mxu0
    %1156 = vmatpush.bf16.msra.mxu0 0
    %1157 = vmatpush.bf16.msra.mxu0 0
    %1158 = vmatpush.bf16.msra.mxu0 0
    %1159 = vmatpush.bf16.msra.mxu0 0
    %1160 = vmatpush.bf16.msra.mxu0 0
    %1161 = vmatpush.bf16.msra.mxu0 0
    %1162 = vmatpush.bf16.msra.mxu0 %v963
    %1163 = vmatpush.bf16.msra.mxu0 %v947
    %1164 = vmatmul.bf16.gmra.mxu0 %v972
    %v1165 = vpop.f32.mrf.mxu0
    %v1166 = vadd.f32 %v969, %v1165
    %v1167 = vpop.f32.mrf.mxu0
    %1168 = vdwg.mxu0
    %1169 = vmatpush.bf16.msra.mxu0 0
    %1170 = vmatpush.bf16.msra.mxu0 0
    %1171 = vmatpush.bf16.msra.mxu0 0
    %1172 = vmatpush.bf16.msra.mxu0 0
    %1173 = vmatpush.bf16.msra.mxu0 0
    %1174 = vmatpush.bf16.msra.mxu0 0
    %1175 = vmatpush.bf16.msra.mxu0 %v964
    %1176 = vmatpush.bf16.msra.mxu0 %v948
    %1177 = vmatmul.bf16.gmra.mxu0 %v972
    %v1178 = vpop.f32.mrf.mxu0
    %v1179 = vadd.f32 %v969, %v1178
    %v1180 = vpop.f32.mrf.mxu0
    %1181 = vdwg.mxu0
    %1182 = vst [vmem:[#allocation2] sm:$0xff] %v984
    %1183 = vst [vmem:[#allocation2 + $0x8] sm:$0xff] %v997
    %1184 = vst [vmem:[#allocation2 + $0x10] sm:$0xff] %v1010
    %1185 = vst [vmem:[#allocation2 + $0x18] sm:$0xff] %v1023
    %1186 = vst [vmem:[#allocation2 + $0x20] sm:$0xff] %v1036
    %1187 = vst [vmem:[#allocation2 + $0x28] sm:$0xff] %v1049
    %1188 = vst [vmem:[#allocation2 + $0x30] sm:$0xff] %v1062
    %1189 = vst [vmem:[#allocation2 + $0x38] sm:$0xff] %v1075
    %1190 = vst [vmem:[#allocation2 + $0x40] sm:$0xff] %v1088
    %1191 = vst [vmem:[#allocation2 + $0x48] sm:$0xff] %v1101
    %1192 = vst [vmem:[#allocation2 + $0x50] sm:$0xff] %v1114
    %1193 = vst [vmem:[#allocation2 + $0x58] sm:$0xff] %v1127
    %1194 = vst [vmem:[#allocation2 + $0x60] sm:$0xff] %v1140
    %1195 = vst [vmem:[#allocation2 + $0x68] sm:$0xff] %v1153
    %1196 = vst [vmem:[#allocation2 + $0x70] sm:$0xff] %v1166
    %1197 = vst [vmem:[#allocation2 + $0x78] sm:$0xff] %v1179
    // Predicated region
    $region30: #{tpu_custom_call.1} parent=1 // pred_check
      _
    $region31: #{tpu_custom_call.1} parent=1 // pred_check_branch
      %1199 = sbr.rel (0) target = $region33
    $region32: #{tpu_custom_call.1} parent=1 // pred_region
      %1201 = vsyncadd [#allocation3], 0
      %s1203 = sshll.u32 [#allocation2], 4
      %s1204 = int_to_ptr.vmem [resolvable:$true] %s1203
      %s1205 = sshll.u32 %s7, 4
      %s1206 = int_to_ptr.hbm [resolvable:$true] %s1205
      %1208 = dma.vmem_to_hbm [thread:$0]  %s1204, 2048, %s1206, [#allocation3]
    $region33: #{tpu_custom_call.1} parent=1 // pred_fallthru
      _
    // Predicated region
    $region34: #{tpu_custom_call.1} parent=1 // pred_check
      _
    $region35: #{tpu_custom_call.1} parent=1 // pred_check_branch
      %1210 = sbr.rel (0) target = $region37
    $region36: #{tpu_custom_call.1} parent=1 // pred_region
      %1212 = dma.done [#allocation3], 2048
    $region37: #{tpu_custom_call.1} parent=1 // pred_fallthru
      _
    %1213 = vsyncpa [#allocation3], 1

</llo_original>
